<compile_context>
chip_gen: v6e
topology: v6e:2x2x1
jax: 0.10.0
libtpu: 0.0.40
codegen_flags: <defaults>
</compile_context>

<pallas_src>
import functools

import jax
import jax.numpy as jnp
from jax.experimental import pallas as pl
from jax.experimental.pallas import tpu as pltpu


def _task_decomp_kernel(rw_ref, feat_ref, cb_ref, out_ref):
    """out[b, :, tile] = relu(rw[b] @ feat[b, :, tile] + bias)."""
    # rw_ref  : (1, FC, C_in)  attention-folded reduction weight (stream dtype)
    # feat_ref: (1, C_in, T)   streamed feature tile             (stream dtype)
    # cb_ref  : (FC, 1)        reduction-conv bias, f32, VMEM resident
    # out_ref : (1, FC, T)
    o = jnp.dot(rw_ref[0], feat_ref[0], preferred_element_type=jnp.float32)
    o = o + cb_ref[...]
    out_ref[0] = jnp.maximum(o, 0.0).astype(out_ref.dtype)


def _round_up(x, m):
    return -(-x // m) * m


def _vmem_budget_bytes():
    """Generation-aware scoped-VMEM limit and pipelined-buffer budget."""
    try:
        cap = int(pltpu.get_tpu_info().vmem_capacity_bytes)
    except Exception:  # conservative fallback: v7x physical VMEM per core
        cap = 64 << 20
    # Scoped limit: <= 3/4 of physical, always leaving >= 12 MiB headroom.
    limit = max(16 << 20, min(cap * 3 // 4, cap - (12 << 20)))
    # Budget for the double-buffered feat/out tiles; weights are tiny but
    # leave a few MiB for them + compiler scratch.  Cap at 48 MiB -- beyond
    # that the DMA pipeline is already at the HBM roofline on every chip.
    budget = min(limit - (4 << 20), 48 << 20)
    return budget, limit


def _pick_hw_tile(hw, c_in, fc, in_bytes, out_bytes, budget, min_steps):
    """Largest lane-aligned HW tile whose double-buffered working set fits."""
    hw128 = _round_up(hw, 128)                        # lane-dense stores
    per_col = 2 * (c_in * in_bytes + fc * out_bytes)  # dbl-buffered bytes/column
    t_cap = min(hw128, max(128, (budget // per_col) // 128 * 128))
    n = -(-hw128 // t_cap)
    if n < min_steps and hw128 >= 128 * min_steps:    # keep both v7x TCs busy
        n = min_steps
    t = _round_up(-(-hw128 // n), 128)
    return t, n * t, n


@functools.partial(
    jax.jit,
    static_argnames=("feat_channels", "stacked_convs", "stream_dtype"))
def task_decomposition(feat, w1, b1, w2, b2, conv_w, conv_b, avg_feat=None,
                       *, feat_channels, stacked_convs, stream_dtype=None):
    """TOOD TaskDecomposition forward.  feat: (B, C_in, H, W), NCHW."""
    B, C_in, H, W = feat.shape
    assert C_in == feat_channels * stacked_convs
    HW = H * W
    FC = feat_channels
    sdtype = feat.dtype if stream_dtype is None else jnp.dtype(stream_dtype)

    # ---- layer attention + scale fold: O(B*C_in) work, plain XLA, all f32 --
    if avg_feat is None:
        avg = jnp.mean(feat.astype(jnp.float32), axis=(2, 3))        # (B, C_in)
    else:
        avg = avg_feat.reshape(B, C_in).astype(jnp.float32)
    h1 = jnp.maximum(avg @ w1.T.astype(jnp.float32) + b1, 0.0)       # (B, mid)
    att = jax.nn.sigmoid(h1 @ w2.T.astype(jnp.float32) + b2)         # (B, S)
    # per-input-channel scale: scale[b, k] = att[b, k // FC]
    scale = jnp.repeat(att, FC, axis=1)                              # (B, C_in)
    rw = conv_w.astype(jnp.float32)[None] * scale[:, None, :]        # (B, FC, C_in)
    rw = rw.astype(sdtype)
    cbc = conv_b.reshape(FC, 1).astype(jnp.float32)

    # ---- VMEM-aware, lane-aligned HW tiling --------------------------------
    budget, vmem_limit = _vmem_budget_bytes()
    elem_bytes = jnp.dtype(sdtype).itemsize
    min_steps = 1 if B >= 2 else 2   # B == 1: split HW so both v7x TCs get work
    T, hw_pad, n_hw = _pick_hw_tile(HW, C_in, FC, elem_bytes, elem_bytes,
                                    budget, min_steps)

    feat2 = feat.reshape(B, C_in, HW).astype(sdtype)
    if hw_pad != HW:
        feat2 = jnp.pad(feat2, ((0, 0), (0, 0), (0, hw_pad - HW)))

    out2 = pl.pallas_call(
        _task_decomp_kernel,
        out_shape=jax.ShapeDtypeStruct((B, FC, hw_pad), sdtype),
        grid=(B, n_hw),
        in_specs=[
            pl.BlockSpec((1, FC, C_in), lambda b, t: (b, 0, 0)),  # rw (per batch)
            pl.BlockSpec((1, C_in, T), lambda b, t: (b, 0, t)),   # feat tile
            pl.BlockSpec((FC, 1), lambda b, t: (0, 0)),           # bias (resident)
        ],
        out_specs=pl.BlockSpec((1, FC, T), lambda b, t: (b, 0, t)),
        compiler_params=pltpu.CompilerParams(
            dimension_semantics=("parallel", "parallel"),
            vmem_limit_bytes=vmem_limit),
    )(rw, feat2, cbc)

    return out2[:, :, :HW].reshape(B, FC, H, W)


def _reference(feat, w1, b1, w2, b2, conv_w, conv_b, feat_channels, stacked_convs):
    # Pure-JAX replica of the PyTorch forward for verification.
    B, C_in, H, W = feat.shape
    avg = jnp.mean(feat, axis=(2, 3))                              # (B, C_in)
    h1 = jnp.maximum(avg @ w1.T + b1, 0.0)                         # (B, mid)
    att = jax.nn.sigmoid(h1 @ w2.T + b2)                           # (B, S)
    cw = conv_w.reshape(1, feat_channels, stacked_convs, feat_channels)
    rew = att.reshape(B, 1, stacked_convs, 1) * cw                 # (B, FC, S, FC)
    rew = rew.reshape(B, feat_channels, C_in)
    feat_2d = feat.reshape(B, C_in, H * W)
    out = jnp.einsum("bfc,bcs->bfs", rew, feat_2d)
    out = out.reshape(B, feat_channels, H, W) + conv_b.reshape(1, -1, 1, 1)
    return jnp.maximum(out, 0.0)


if __name__ == "__main__":
    feat_channels = 32
    stacked_convs = 4
    la_down_rate = 8
    in_channels = feat_channels * stacked_convs                    # 128
    mid = in_channels // la_down_rate                              # 16
    B, H, W = 2, 16, 16

    key = jax.random.PRNGKey(0)
    k_feat, k_w1, k_w2, k_cw = jax.random.split(key, 4)

    feat = jax.random.normal(k_feat, (B, in_channels, H, W), dtype=jnp.float32)

    # deterministic init matching the module's init_weights():
    #   layer-attention conv weights ~ N(0, 0.001), biases = 0
    #   reduction conv weight ~ N(0, 0.01), bias = 0
    w1 = 0.001 * jax.random.normal(k_w1, (mid, in_channels), dtype=jnp.float32)
    b1 = jnp.zeros((mid,), dtype=jnp.float32)
    w2 = 0.001 * jax.random.normal(k_w2, (stacked_convs, mid), dtype=jnp.float32)
    b2 = jnp.zeros((stacked_convs,), dtype=jnp.float32)
    conv_w = 0.01 * jax.random.normal(k_cw, (feat_channels, in_channels),
                                      dtype=jnp.float32)
    conv_b = jnp.zeros((feat_channels,), dtype=jnp.float32)

    out = task_decomposition(feat, w1, b1, w2, b2, conv_w, conv_b,
                             feat_channels=feat_channels,
                             stacked_convs=stacked_convs)
    out = jax.block_until_ready(out)

    ref = _reference(feat, w1, b1, w2, b2, conv_w, conv_b,
                     feat_channels, stacked_convs)
    assert out.shape == (B, feat_channels, H, W)
    assert jnp.allclose(out, ref, atol=1e-5, rtol=1e-5), \
        float(jnp.max(jnp.abs(out - ref)))

    print("KERNEL_OK")
</pallas_src>

<mosaic_0001>
module attributes {stable_mosaic.version = 11 : i64} {
  func.func @_task_decomp_kernel(%arg0: i32, %arg1: i32, %arg2: memref<1x32x128xf32, #tpu.memory_space<vmem>>, %arg3: memref<1x128x256xf32, #tpu.memory_space<vmem>>, %arg4: memref<32x1xf32, #tpu.memory_space<vmem>>, %arg5: memref<1x32x256xf32, #tpu.memory_space<vmem>>) attributes {dimension_semantics = [#tpu.dimension_semantics<parallel>, #tpu.dimension_semantics<parallel>], iteration_bounds = array<i64: 2, 1>, scalar_prefetch = 0 : i64, scratch_operands = 0 : i64, tpu.core_type = #tpu.core_type<tc>, window_params = [{transform_indices = @transform_0, window_bounds = array<i64: 1, 32, 128>}, {transform_indices = @transform_1, window_bounds = array<i64: 1, 128, 256>}, {pipeline_mode = #tpu.pipeline_mode<synchronous>, transform_indices = @transform_2, window_bounds = array<i64: 32, 1>}, {transform_indices = @transform_3, window_bounds = array<i64: 1, 32, 256>}]} {
    %c0 = arith.constant 0 : index
    %c0_0 = arith.constant 0 : index
    %c0_1 = arith.constant 0 : index
    %0 = vector.load %arg2[%c0, %c0_0, %c0_1] : memref<1x32x128xf32, #tpu.memory_space<vmem>>, vector<1x32x128xf32>
    %1 = vector.shape_cast %0 : vector<1x32x128xf32> to vector<32x128xf32>
    %c0_2 = arith.constant 0 : index
    %c0_3 = arith.constant 0 : index
    %c0_4 = arith.constant 0 : index
    %2 = vector.load %arg3[%c0_2, %c0_3, %c0_4] : memref<1x128x256xf32, #tpu.memory_space<vmem>>, vector<1x128x256xf32>
    %3 = vector.shape_cast %2 : vector<1x128x256xf32> to vector<128x256xf32>
    %cst = arith.constant dense<0.000000e+00> : vector<32x256xf32>
    %4 = tpu.matmul %1, %3, %cst {dimension_numbers = #tpu.dot_dimension_numbers<[1], [0], [0], [1], [0, 0, 1, 1], [], []>} : vector<32x128xf32>, vector<128x256xf32>, vector<32x256xf32> -> vector<32x256xf32>
    %c0_5 = arith.constant 0 : index
    %c0_6 = arith.constant 0 : index
    %5 = vector.load %arg4[%c0_5, %c0_6] : memref<32x1xf32, #tpu.memory_space<vmem>>, vector<32x1xf32>
    %6 = vector.broadcast %5 : vector<32x1xf32> to vector<32x256xf32>
    %7 = arith.addf %4, %6 : vector<32x256xf32>
    %cst_7 = arith.constant 0.000000e+00 : f32
    %8 = vector.broadcast %cst_7 : f32 to vector<32x256xf32>
    %9 = arith.maximumf %7, %8 : vector<32x256xf32>
    %c0_8 = arith.constant 0 : index
    %c0_9 = arith.constant 0 : index
    %c0_10 = arith.constant 0 : index
    %10 = vector.load %arg5[%c0_8, %c0_9, %c0_10] : memref<1x32x256xf32, #tpu.memory_space<vmem>>, vector<1x32x256xf32>
    %11 = vector.shape_cast %10 : vector<1x32x256xf32> to vector<32x256xf32>
    %12 = vector.shape_cast %9 : vector<32x256xf32> to vector<1x32x256xf32>
    tpu.vector_store %arg5[%c0_8, %c0_9, %c0_10], %12 {strides = array<i32>} : memref<1x32x256xf32, #tpu.memory_space<vmem>>, vector<1x32x256xf32>,
    return
  }
  func.func @transform_0(%arg0: i32, %arg1: i32) -> (i32, i32, i32) {
    %c0_i32 = arith.constant 0 : i32
    %c0_i32_0 = arith.constant 0 : i32
    %c0_i32_1 = arith.constant 0 : i32
    return %arg0, %c0_i32, %c0_i32_0 : i32, i32, i32
  }
  func.func @transform_1(%arg0: i32, %arg1: i32) -> (i32, i32, i32) {
    %c0_i32 = arith.constant 0 : i32
    %c0_i32_0 = arith.constant 0 : i32
    return %arg0, %c0_i32, %arg1 : i32, i32, i32
  }
  func.func @transform_2(%arg0: i32, %arg1: i32) -> (i32, i32) {
    %c0_i32 = arith.constant 0 : i32
    %c0_i32_0 = arith.constant 0 : i32
    %c0_i32_1 = arith.constant 0 : i32
    return %c0_i32, %c0_i32_0 : i32, i32
  }
  func.func @transform_3(%arg0: i32, %arg1: i32) -> (i32, i32, i32) {
    %c0_i32 = arith.constant 0 : i32
    %c0_i32_0 = arith.constant 0 : i32
    return %arg0, %c0_i32, %arg1 : i32, i32, i32
  }
}

</mosaic_0001>

<llo_original>
// kernel: mul.11
$region0: #{mul.11}
  %s0 = inlined_call_operand.vmem [shape: f32[2,4,32], index: 0, kind: input, shape index: {}]
  %s1 = inlined_call_operand.vmem [shape: f32[2,128], index: 1, kind: output, shape index: {}]
  $region1: #{mul.11} parent=0
    #allocation0 [shape = 'u8[4096]{0}', space=vmem, size = 0x1000, scoped, tag = 'scoped mem for output reshape']
    #allocation1 [shape = 'u8[8192]{0}', space=vmem, size = 0x2000, scoped, tag = 'scoped mem for input reshape']
    %s3 = sshll.u32 1, 4
    %s4 = ssub.s32 %s3, 1
    %s5 = scalar_lea.vmem %s0, 4
    %v6 = vld [vmem:[%s5] sm:%s4]
    %s7 = scalar_lea.vmem [#allocation1], 8
    %8 = vst [vmem:[%s7] sm:%s4] %v6
    %v9 = vld [vmem:[%s0] sm:%s4]
    %10 = vst [vmem:[#allocation1] sm:%s4] %v9
    %s11 = smov 3
    %v12 = vld [vmem:[#allocation1] ss:$8 sm:%s11]
    %vm13 = vcmask 261120
    %14 = vst.msk [vmem:[#allocation0] sm:$0x3] %vm13, %v12
    %s15 = scalar_lea.vmem [#allocation1], 3
    %s16 = smov 3
    %v17 = vld [vmem:[%s15] ss:$8 sm:%s16]
    %18 = vrot.lane.b32.xlu0 %v17, 96
    %v19 = vpop.permute.xlu0 %18
    %vm20 = vcmask 1048320
    %21 = vst.msk [vmem:[#allocation0] sm:$0x3] %vm20, %v19
    %s22 = scalar_lea.vmem [#allocation1], 2
    %s23 = smov 3
    %v24 = vld [vmem:[%s22] ss:$8 sm:%s23]
    %25 = vrot.lane.b32.xlu0 %v24, 64
    %v26 = vpop.permute.xlu0 %25
    %vm27 = vcmask 785920
    %28 = vst.msk [vmem:[#allocation0] sm:$0x3] %vm27, %v26
    %s29 = scalar_lea.vmem [#allocation1], 1
    %s30 = smov 3
    %v31 = vld [vmem:[%s29] ss:$8 sm:%s30]
    %32 = vrot.lane.b32.xlu0 %v31, 32
    %v33 = vpop.permute.xlu0 %32
    %vm34 = vcmask 523520
    %35 = vst.msk [vmem:[#allocation0] sm:$0x3] %vm34, %v33
    %s37 = sshll.u32 1, 2
    %s38 = ssub.s32 %s37, 1
    %v40 = vld [vmem:[#allocation0] sm:%s38]
    %s41 = sshll.u32 1, 2
    %s42 = ssub.s32 %s41, 1
    %43 = vst [vmem:[%s1] sm:%s42] %v40

// kernel: task_decomposition.1
$region0: #{task_decomposition.1}
  #allocation0 [shape = 'u32[]', space=smem, size = 0x4, offset = 0x4, fixed_abs, tag = 'smem constant byte address 0x4 - core index']
  #allocation1 [shape = 'u32[144,128]{1,0:T(1,128)}', space=vmem, size = 0x12000, scoped, tag = 'internal scratch']
  %s0 = inlined_call_operand.vmem [shape: f32[2,32,128], index: 0, kind: input, shape index: {}]
  %s1 = inlined_call_operand.vmem [shape: f32[2,128,256], index: 1, kind: input, shape index: {}]
  %s2 = inlined_call_operand.vmem [shape: f32[32,1], index: 2, kind: input, shape index: {}]
  %s3 = inlined_call_operand.vmem [shape: f32[2,32,256], index: 3, kind: output, shape index: {}]
  %s4 = sld [smem:[#allocation0]]
  $region45: #{task_decomposition.1} parent=0
    _
  %s6 = ssub.s32 1, %s4
  %s7 = scalar_select 0, %s6, %s4
  loop: start=0, step=1, limit=4
  $region2: #{task_decomposition.1} parent=0 // loop_pre_header
    _
  $region3: #{task_decomposition.1} parent=0 // loop_header
    %s9 = sphi 0, %s13
    %p10 = scmp.ge.s32.totalorder %s9, 4
    %s16 = sphi 0, %s28
    %s17 = sphi 0, %s24
    %s18 = sphi 0, %s16
    %s19 = sphi 0, %s17
    %s20 = sphi 0, %s18
    %s21 = sphi 0, %s19
    %s31 = sphi 0, %s33
    %s34 = sphi 0, %s31
    %s35 = sphi 0, %s34
    %s51 = sphi 0, %s35
    %s59 = sphi 0, %s61
    %s62 = sphi 0, %s59
    %s63 = sphi 0, %s62
    %s79 = sphi 0, %s63
    %s83 = sphi 0, %s83
    %s85 = sphi 0, %s83
    %s86 = sphi 0, %s85
    %s100 = sphi 0, %s86
    %s108 = sphi 0, %s110
    %s111 = sphi 0, %s108
    %s112 = sphi 0, %s111
    %s128 = sphi 0, %s112
  $region4: #{task_decomposition.1} parent=0 // loop_header_branch
    %12 = sbr.rel (%p10) target = $region8
  $region5: #{task_decomposition.1} parent=0 // loop_body
    %s14 = ssub.s32 %s9, 1
    %s15 = ssub.s32 %s9, 2
    %s22 = sadd.s32 1, %s17
    %p23 = scmp.ge.s32.totalorder %s22, 1
    %s24 = scalar_select %p23, 0, %s22
    %s25 = sadd.s32 1, %s16
    %s26 = scalar_select %p23, %s25, %s16
    %p27 = scmp.ge.s32.totalorder %s26, 2
    %s28 = scalar_select %p27, 0, %s26
    %s29 = ssub.s32 %s16, %s28
    %p30 = scmp.eq.s32.totalorder %s29, 0
    %s32 = sadd.s32 %s31, 1
    %s33 = scalar_select %p30, %s31, %s32
    %p36 = pneg %p30
    %p37 = scmp.eq.s32.totalorder %s9, 1
    %p38 = por %p36, %p37
    %p39 = scmp.ne.s32.totalorder %s31, %s34
    %p40 = scmp.eq.s32.totalorder %s9, 0
    %p41 = por %p39, %p40
    %p42 = scmp.ne.s32.totalorder %s31, %s34
    %p43 = scmp.eq.s32.totalorder %s14, 1
    %p44 = por %p42, %p43
    %p45 = scmp.ne.s32.totalorder %s34, %s35
    %p46 = scmp.eq.s32.totalorder %s14, 0
    %p47 = por %p45, %p46
    %p48 = scmp.ne.s32.totalorder %s34, %s35
    %p49 = scmp.eq.s32.totalorder %s15, 1
    %p50 = por %p48, %p49
    %p52 = scmp.ne.s32.totalorder %s35, %s51
    %p53 = scmp.eq.s32.totalorder %s15, 0
    %p54 = por %p52, %p53
    %s55 = ssub.s32 %s16, %s28
    %s56 = ssub.s32 %s17, %s24
    %s57 = sor.u32 %s55, %s56
    %p58 = scmp.eq.s32.totalorder %s57, 0
    %s60 = sadd.s32 %s59, 1
    %s61 = scalar_select %p58, %s59, %s60
    %p64 = pneg %p58
    %p65 = scmp.eq.s32.totalorder %s9, 1
    %p66 = por %p64, %p65
    %p67 = scmp.ne.s32.totalorder %s59, %s62
    %p68 = scmp.eq.s32.totalorder %s9, 0
    %p69 = por %p67, %p68
    %p70 = scmp.ne.s32.totalorder %s59, %s62
    %p71 = scmp.eq.s32.totalorder %s14, 1
    %p72 = por %p70, %p71
    %p73 = scmp.ne.s32.totalorder %s62, %s63
    %p74 = scmp.eq.s32.totalorder %s14, 0
    %p75 = por %p73, %p74
    %p76 = scmp.ne.s32.totalorder %s62, %s63
    %p77 = scmp.eq.s32.totalorder %s15, 1
    %p78 = por %p76, %p77
    %p80 = scmp.ne.s32.totalorder %s63, %s79
    %p81 = scmp.eq.s32.totalorder %s15, 0
    %p82 = por %p80, %p81
    %s84 = sadd.s32 %s83, 1
    %p87 = scmp.eq.s32.totalorder %s9, 1
    %p88 = scmp.ne.s32.totalorder %s83, %s85
    %p89 = scmp.eq.s32.totalorder %s9, 0
    %p90 = por %p88, %p89
    %p91 = scmp.ne.s32.totalorder %s83, %s85
    %p92 = scmp.eq.s32.totalorder %s14, 1
    %p93 = por %p91, %p92
    %p94 = scmp.ne.s32.totalorder %s85, %s86
    %p95 = scmp.eq.s32.totalorder %s14, 0
    %p96 = por %p94, %p95
    %p97 = scmp.ne.s32.totalorder %s85, %s86
    %p98 = scmp.eq.s32.totalorder %s15, 1
    %p99 = por %p97, %p98
    %p101 = scmp.ne.s32.totalorder %s86, %s100
    %p102 = scmp.eq.s32.totalorder %s15, 0
    %p103 = por %p101, %p102
    %s104 = ssub.s32 %s16, %s28
    %s105 = ssub.s32 %s17, %s24
    %s106 = sor.u32 %s104, %s105
    %p107 = scmp.eq.s32.totalorder %s106, 0
    %s109 = sadd.s32 %s108, 1
    %s110 = scalar_select %p107, %s108, %s109
    %p113 = pneg %p107
    %p114 = scmp.eq.s32.totalorder %s9, 1
    %p115 = por %p113, %p114
    %p116 = scmp.ne.s32.totalorder %s108, %s111
    %p117 = scmp.eq.s32.totalorder %s9, 0
    %p118 = por %p116, %p117
    %p119 = scmp.ne.s32.totalorder %s108, %s111
    %p120 = scmp.eq.s32.totalorder %s14, 1
    %p121 = por %p119, %p120
    %p122 = scmp.ne.s32.totalorder %s111, %s112
    %p123 = scmp.eq.s32.totalorder %s14, 0
    %p124 = por %p122, %p123
    %p125 = scmp.ne.s32.totalorder %s111, %s112
    %p126 = scmp.eq.s32.totalorder %s15, 1
    %p127 = por %p125, %p126
    %p129 = scmp.ne.s32.totalorder %s112, %s128
    %p130 = scmp.eq.s32.totalorder %s15, 0
    %p131 = por %p129, %p130
    %p132 = scmp.le.s32.totalorder 1, %s9
    %p133 = scmp.lt.s32.totalorder %s9, 3
    %p134 = pnand %p132, %p133
    %p135 = pneg %p134
    // Predicated region
    $region9: #{task_decomposition.1} parent=5 // pred_check
      _
    $region10: #{task_decomposition.1} parent=5 // pred_check_branch
      %137 = sbr.rel (%p134) target = $region12
    $region11: #{task_decomposition.1} parent=5 // pred_region
      %s138 = ssub.s32 %s9, 1
      // Predicated region
      $region13: #{task_decomposition.1} parent=11 // pred_check
        %p139 = pneg %p96
      $region14: #{task_decomposition.1} parent=11 // pred_check_branch
        %141 = sbr.rel (%p139) target = $region16
      $region15: #{task_decomposition.1} parent=11 // pred_region
        _
      $region16: #{task_decomposition.1} parent=11 // pred_fallthru
        _
    $region12: #{task_decomposition.1} parent=5 // pred_fallthru
      _
    %p142 = scmp.lt.s32.totalorder %s9, 2
    // Predicated region
    $region17: #{task_decomposition.1} parent=5 // pred_check
      %p143 = pneg %p142
    $region18: #{task_decomposition.1} parent=5 // pred_check_branch
      %145 = sbr.rel (%p143) target = $region20
    $region19: #{task_decomposition.1} parent=5 // pred_region
      // Predicated region
      $region21: #{task_decomposition.1} parent=19 // pred_check
        %p146 = pneg %p41
      $region22: #{task_decomposition.1} parent=19 // pred_check_branch
        %148 = sbr.rel (%p146) target = $region24
      $region23: #{task_decomposition.1} parent=19 // pred_region
        %p149 = scmp.lt.s32.totalorder %s16, 1
        %s150 = scalar_select %p149, %s16, 1
        %s151 = smul.addr %s150, 4
        %s152 = smul.addr %s151, 8
        %s153 = scalar_lea.vmem %s0, %s152
      $region24: #{task_decomposition.1} parent=19 // pred_fallthru
        _
      // Predicated region
      $region25: #{task_decomposition.1} parent=19 // pred_check
        %p154 = pneg %p69
      $region26: #{task_decomposition.1} parent=19 // pred_check_branch
        %156 = sbr.rel (%p154) target = $region28
      $region27: #{task_decomposition.1} parent=19 // pred_region
        %s157 = smul.u32 2, %s17
        %p158 = scmp.lt.s32.totalorder %s16, 1
        %s159 = scalar_select %p158, %s16, 1
        %p160 = scmp.lt.s32.totalorder %s157, 1
        %s161 = scalar_select %p160, %s157, 1
        %s162 = smul.addr %s159, 32
        %s163 = sadd.s32 %s161, %s162
        %s164 = smul.addr %s163, 8
        %s165 = scalar_lea.vmem %s1, %s164
        %s166 = smul.u32 2, %s17
      $region28: #{task_decomposition.1} parent=19 // pred_fallthru
        _
    $region20: #{task_decomposition.1} parent=5 // pred_fallthru
      _
    %p167 = scmp.le.s32.totalorder 1, %s9
    %p168 = scmp.lt.s32.totalorder %s9, 3
    %p169 = pnand %p167, %p168
    %p170 = pneg %p169
    // Predicated region
    $region29: #{task_decomposition.1} parent=5 // pred_check
      _
    $region30: #{task_decomposition.1} parent=5 // pred_check_branch
      %172 = sbr.rel (%p169) target = $region32
    $region31: #{task_decomposition.1} parent=5 // pred_region
      %s173 = ssub.s32 %s9, 1
      %p174 = scmp.lt.s32.totalorder %s18, 1
      %s175 = scalar_select %p174, %s18, 1
      %s176 = smul.addr %s175, 4
      %s177 = smul.addr %s176, 8
      %s178 = scalar_lea.vmem %s0, %s177
      %p179 = pneg %p47
      %p180 = pneg %p44
      %s181 = smul.u32 2, %s19
      %p182 = scmp.lt.s32.totalorder %s18, 1
      %s183 = scalar_select %p182, %s18, 1
      %p184 = scmp.lt.s32.totalorder %s181, 1
      %s185 = scalar_select %p184, %s181, 1
      %s186 = smul.addr %s183, 32
      %s187 = sadd.s32 %s185, %s186
      %s188 = smul.addr %s187, 8
      %s189 = scalar_lea.vmem %s1, %s188
      %p190 = pneg %p75
      %p191 = pneg %p72
      %p192 = pneg %p96
      %p193 = pneg %p93
      %p194 = pneg %p124
      %p195 = pneg %p121
      %s196 = smul.u32 2, %s19
      %p197 = scmp.lt.s32.totalorder %s18, 1
      %s198 = scalar_select %p197, %s18, 1
      %p199 = scmp.lt.s32.totalorder %s196, 1
      %s200 = scalar_select %p199, %s196, 1
      %s201 = smul.addr %s198, 8
      %s202 = sadd.s32 %s200, %s201
      %s203 = smul.addr %s202, 8
      %s204 = scalar_lea.vmem %s3, %s203
      %p205 = scmp.lt.s32.totalorder %s18, 1
      %s206 = scalar_select %p205, %s18, 1
      %s207 = smul.addr %s206, 4
      %s208 = smul.addr %s207, 8
      %s209 = scalar_lea.vmem %s0, %s208
      %s210 = smul.u32 2, %s19
      %p211 = scmp.lt.s32.totalorder %s18, 1
      %s212 = scalar_select %p211, %s18, 1
      %p213 = scmp.lt.s32.totalorder %s210, 1
      %s214 = scalar_select %p213, %s210, 1
      %s215 = smul.addr %s212, 32
      %s216 = sadd.s32 %s214, %s215
      %s217 = smul.addr %s216, 8
      %s218 = scalar_lea.vmem %s1, %s217
      %s219 = smul.u32 2, %s19
      %s220 = smul.u32 2, %s19
      %p221 = scmp.lt.s32.totalorder %s18, 1
      %s222 = scalar_select %p221, %s18, 1
      %p223 = scmp.lt.s32.totalorder %s220, 1
      %s224 = scalar_select %p223, %s220, 1
      %s225 = smul.addr %s222, 8
      %s226 = sadd.s32 %s224, %s225
      %s227 = smul.addr %s226, 8
      %s228 = scalar_lea.vmem %s3, %s227
      %s229 = smul.u32 2, %s19
      %v230 = vld [vmem:[%s209] sm:$0xff]
      %v231 = vld [vmem:[%s209 + $0x8] sm:$0xff]
      %v232 = vld [vmem:[%s209 + $0x10] sm:$0xff]
      %v233 = vld [vmem:[%s209 + $0x18] sm:$0xff]
      %v234 = vld [vmem:[%s218] sm:$0xff]
      %v235 = vld [vmem:[%s218 + $0x8] sm:$0xff]
      %v236 = vld [vmem:[%s218 + $0x10] sm:$0xff]
      %v237 = vld [vmem:[%s218 + $0x18] sm:$0xff]
      %v238 = vld [vmem:[%s218 + $0x20] sm:$0xff]
      %v239 = vld [vmem:[%s218 + $0x28] sm:$0xff]
      %v240 = vld [vmem:[%s218 + $0x30] sm:$0xff]
      %v241 = vld [vmem:[%s218 + $0x38] sm:$0xff]
      %v242 = vld [vmem:[%s218 + $0x40] sm:$0xff]
      %v243 = vld [vmem:[%s218 + $0x48] sm:$0xff]
      %v244 = vld [vmem:[%s218 + $0x50] sm:$0xff]
      %v245 = vld [vmem:[%s218 + $0x58] sm:$0xff]
      %v246 = vld [vmem:[%s218 + $0x60] sm:$0xff]
      %v247 = vld [vmem:[%s218 + $0x68] sm:$0xff]
      %v248 = vld [vmem:[%s218 + $0x70] sm:$0xff]
      %v249 = vld [vmem:[%s218 + $0x78] sm:$0xff]
      %v250 = vld [vmem:[%s218 + $0x80] sm:$0xff]
      %v251 = vld [vmem:[%s218 + $0x88] sm:$0xff]
      %v252 = vld [vmem:[%s218 + $0x90] sm:$0xff]
      %v253 = vld [vmem:[%s218 + $0x98] sm:$0xff]
      %v254 = vld [vmem:[%s218 + $0xa0] sm:$0xff]
      %v255 = vld [vmem:[%s218 + $0xa8] sm:$0xff]
      %v256 = vld [vmem:[%s218 + $0xb0] sm:$0xff]
      %v257 = vld [vmem:[%s218 + $0xb8] sm:$0xff]
      %v258 = vld [vmem:[%s218 + $0xc0] sm:$0xff]
      %v259 = vld [vmem:[%s218 + $0xc8] sm:$0xff]
      %v260 = vld [vmem:[%s218 + $0xd0] sm:$0xff]
      %v261 = vld [vmem:[%s218 + $0xd8] sm:$0xff]
      %v262 = vld [vmem:[%s218 + $0xe0] sm:$0xff]
      %v263 = vld [vmem:[%s218 + $0xe8] sm:$0xff]
      %v264 = vld [vmem:[%s218 + $0xf0] sm:$0xff]
      %v265 = vld [vmem:[%s218 + $0xf8] sm:$0xff]
      %v266 = vld [vmem:[%s2] sm:$0xff]
      %v267 = vld [vmem:[%s2 + $0x8] sm:$0xff]
      %v268 = vld [vmem:[%s2 + $0x10] sm:$0xff]
      %v269 = vld [vmem:[%s2 + $0x18] sm:$0xff]
      %271 = vset.pattern.permute.xlu0 0
      %272 = vperm.xlu0 %271, %v266
      %v273 = vpop.permute.xlu0 %272
      %276 = vset.pattern.permute.xlu0 0
      %277 = vperm.xlu0 %276, %v267
      %v278 = vpop.permute.xlu0 %277
      %281 = vset.pattern.permute.xlu0 0
      %282 = vperm.xlu0 %281, %v268
      %v283 = vpop.permute.xlu0 %282
      %286 = vset.pattern.permute.xlu0 0
      %287 = vperm.xlu0 %286, %v269
      %v288 = vpop.permute.xlu0 %287
      %290 = vmatprep.subr.mxu0 %v265
      %291 = vmatpush1.msra.mxu0 %v264
      %292 = vmatprep.subr.mxu0 %v263
      %293 = vmatpush1.msra.mxu0 %v262
      %294 = vmatprep.subr.mxu0 %v261
      %295 = vmatpush1.msra.mxu0 %v260
      %296 = vmatprep.subr.mxu0 %v259
      %297 = vmatpush1.msra.mxu0 %v258
      %298 = vmatprep.subr.mxu0 %v257
      %299 = vmatpush1.msra.mxu0 %v256
      %300 = vmatprep.subr.mxu0 %v255
      %301 = vmatpush1.msra.mxu0 %v254
      %302 = vmatprep.subr.mxu0 %v253
      %303 = vmatpush1.msra.mxu0 %v252
      %304 = vmatprep.subr.mxu0 %v251
      %305 = vmatpush1.msra.mxu0 %v250
      %306 = vmatprep.subr.mxu0 %v249
      %307 = vmatpush1.msra.mxu0 %v248
      %308 = vmatprep.subr.mxu0 %v247
      %309 = vmatpush1.msra.mxu0 %v246
      %310 = vmatprep.subr.mxu0 %v245
      %311 = vmatpush1.msra.mxu0 %v244
      %312 = vmatprep.subr.mxu0 %v243
      %313 = vmatpush1.msra.mxu0 %v242
      %314 = vmatprep.subr.mxu0 %v241
      %315 = vmatpush1.msra.mxu0 %v240
      %316 = vmatprep.subr.mxu0 %v239
      %317 = vmatpush1.msra.mxu0 %v238
      %318 = vmatprep.subr.mxu0 %v237
      %319 = vmatpush1.msra.mxu0 %v236
      %320 = vmatprep.subr.mxu0 %v235
      %321 = vmatpush1.msra.mxu0 %v234
      %322 = vmatprep.subr.mxu0 0.0
      %323 = vmatpush2.msra.mxu0 0.0
      %324 = vmatprep.subr.mxu0 0.0
      %325 = vmatpush2.msra.mxu0 0.0
      %326 = vmatprep.subr.mxu0 0.0
      %327 = vmatpush2.msra.mxu0 0.0
      %328 = vmatprep.subr.mxu0 0.0
      %329 = vmatpush2.msra.mxu0 0.0
      %330 = vmatprep.subr.mxu0 0.0
      %331 = vmatpush2.msra.mxu0 0.0
      %332 = vmatprep.subr.mxu0 0.0
      %333 = vmatpush2.msra.mxu0 0.0
      %334 = vmatprep.subr.mxu0 0.0
      %335 = vmatpush2.msra.mxu0 0.0
      %336 = vmatprep.subr.mxu0 0.0
      %337 = vmatpush2.msra.mxu0 0.0
      %338 = vmatprep.subr.mxu0 0.0
      %339 = vmatpush2.msra.mxu0 0.0
      %340 = vmatprep.subr.mxu0 0.0
      %341 = vmatpush2.msra.mxu0 0.0
      %342 = vmatprep.subr.mxu0 0.0
      %343 = vmatpush2.msra.mxu0 0.0
      %344 = vmatprep.subr.mxu0 0.0
      %345 = vmatpush2.msra.mxu0 0.0
      %346 = vmatprep.subr.mxu0 0.0
      %347 = vmatpush2.msra.mxu0 0.0
      %348 = vmatprep.subr.mxu0 0.0
      %349 = vmatpush2.msra.mxu0 0.0
      %350 = vmatprep.subr.mxu0 0.0
      %351 = vmatpush2.msra.mxu0 0.0
      %352 = vmatprep.subr.mxu0 0.0
      %353 = vmatpush2.msra.mxu0 0.0
      %354 = vmatprep.mubr.f32.mxu0 0.0
      %355 = vmatmul.mubr.f32.gmra.mxu0 %v230
      %v356 = vpop.f32.mrf.mxu0
      %v357 = vadd.f32 %v273, %v356
      %v358 = vpop.f32.mrf.mxu0
      %v359 = vadd.f32 %v273, %v358
      %360 = vmatprep.mubr.f32.mxu0 0.0
      %361 = vmatmul.mubr.f32.gmra.mxu0 %v231
      %v362 = vpop.f32.mrf.mxu0
      %v363 = vadd.f32 %v278, %v362
      %v364 = vpop.f32.mrf.mxu0
      %v365 = vadd.f32 %v278, %v364
      %366 = vmatprep.mubr.f32.mxu0 0.0
      %367 = vmatmul.mubr.f32.gmra.mxu0 %v232
      %v368 = vpop.f32.mrf.mxu0
      %v369 = vadd.f32 %v283, %v368
      %v370 = vpop.f32.mrf.mxu0
      %v371 = vadd.f32 %v283, %v370
      %372 = vmatprep.mubr.f32.mxu0 0.0
      %373 = vmatmul.mubr.f32.gmra.mxu0 %v233
      %v374 = vpop.f32.mrf.mxu0
      %v375 = vadd.f32 %v288, %v374
      %v376 = vpop.f32.mrf.mxu0
      %v377 = vadd.f32 %v288, %v376
      %378 = vdwg.mxu0
      %v379 = vmax.f32 %v357, 0.0
      %v380 = vmax.f32 %v359, 0.0
      %v381 = vmax.f32 %v363, 0.0
      %v382 = vmax.f32 %v365, 0.0
      %v383 = vmax.f32 %v369, 0.0
      %v384 = vmax.f32 %v371, 0.0
      %v385 = vmax.f32 %v375, 0.0
      %v386 = vmax.f32 %v377, 0.0
      %387 = vst [vmem:[%s228] sm:$0xff] %v379
      %388 = vst [vmem:[%s228 + $0x8] sm:$0xff] %v380
      %389 = vst [vmem:[%s228 + $0x10] sm:$0xff] %v381
      %390 = vst [vmem:[%s228 + $0x18] sm:$0xff] %v382
      %391 = vst [vmem:[%s228 + $0x20] sm:$0xff] %v383
      %392 = vst [vmem:[%s228 + $0x28] sm:$0xff] %v384
      %393 = vst [vmem:[%s228 + $0x30] sm:$0xff] %v385
      %394 = vst [vmem:[%s228 + $0x38] sm:$0xff] %v386
      %s395 = smul.u32 2, %s19
      %p396 = scmp.lt.s32.totalorder %s18, 1
      %s397 = scalar_select %p396, %s18, 1
      %p398 = scmp.lt.s32.totalorder %s395, 1
      %s399 = scalar_select %p398, %s395, 1
      %s400 = smul.addr %s397, 8
      %s401 = sadd.s32 %s399, %s400
      %s402 = smul.addr %s401, 8
      %s403 = scalar_lea.vmem %s3, %s402
      // Predicated region
      $region33: #{task_decomposition.1} parent=31 // pred_check
        %p404 = pneg %p121
      $region34: #{task_decomposition.1} parent=31 // pred_check_branch
        %406 = sbr.rel (%p404) target = $region36
      $region35: #{task_decomposition.1} parent=31 // pred_region
        %s407 = smul.u32 2, %s19
      $region36: #{task_decomposition.1} parent=31 // pred_fallthru
        _
    $region32: #{task_decomposition.1} parent=5 // pred_fallthru
      _
    %p408 = scmp.le.s32.totalorder 2, %s9
    // Predicated region
    $region37: #{task_decomposition.1} parent=5 // pred_check
      %p409 = pneg %p408
    $region38: #{task_decomposition.1} parent=5 // pred_check_branch
      %411 = sbr.rel (%p409) target = $region40
    $region39: #{task_decomposition.1} parent=5 // pred_region
      %s412 = ssub.s32 %s9, 2
      // Predicated region
      $region41: #{task_decomposition.1} parent=39 // pred_check
        %p413 = pneg %p127
      $region42: #{task_decomposition.1} parent=39 // pred_check_branch
        %415 = sbr.rel (%p413) target = $region44
      $region43: #{task_decomposition.1} parent=39 // pred_region
        %s416 = smul.u32 2, %s21
        %p417 = scmp.lt.s32.totalorder %s20, 1
        %s418 = scalar_select %p417, %s20, 1
        %p419 = scmp.lt.s32.totalorder %s416, 1
        %s420 = scalar_select %p419, %s416, 1
        %s421 = smul.addr %s418, 8
        %s422 = sadd.s32 %s420, %s421
        %s423 = smul.addr %s422, 8
        %s424 = scalar_lea.vmem %s3, %s423
      $region44: #{task_decomposition.1} parent=39 // pred_fallthru
        _
    $region40: #{task_decomposition.1} parent=5 // pred_fallthru
      _
  $region6: #{task_decomposition.1} parent=0 // loop_footer
    %s13 = sadd.s32 1, %s9
  $region7: #{task_decomposition.1} parent=0 // loop_footer_branch
    %8 = sbr.rel target = $region3
  $region8: #{task_decomposition.1} parent=0 // loop_exit
    _

</llo_original>
